<compile_context>
chip_gen: v6e
topology: v6e:2x2x1
jax: 0.10.0
libtpu: 0.0.40
codegen_flags: <defaults>
</compile_context>

<pallas_src>
import functools

import jax
import jax.numpy as jnp
from jax import lax
from jax.experimental import pallas as pl
from jax.experimental.pallas import tpu as pltpu

# (hidden_dim, latent_dim, input_channel, n_class, noise_dim), as in GENERATORCONFIGS.
GENERATOR_CONFIG = dict(hidden_dim=256, latent_dim=32, input_channel=1,
                        n_class=10, noise_dim=32)


# -----------------------------------------------------------------------------
# Generator forward kernel
# -----------------------------------------------------------------------------
def _generator_fwd_kernel(labels_ref, eps_ref, w1_ref, b1_ref, w2_ref, b2_ref,
                          out_ref, *, noise_dim):
    """One batch tile of: LeakyReLU(concat(eps, onehot) @ W1^T + b1) @ W2^T + b2."""
    labels = labels_ref[...]                          # (TB, 1) int32
    eps = eps_ref[...].astype(jnp.float32)            # (TB, ND)
    tb = eps.shape[0]
    n_class = w1_ref.shape[1] - noise_dim

    # In-kernel one-hot (replaces torch scatter_ + concat, no host materialization).
    class_ids = lax.broadcasted_iota(jnp.int32, (tb, n_class), 1)
    onehot = (labels == class_ids).astype(jnp.float32)            # (TB, NC)

    w1 = w1_ref[...].astype(jnp.float32)              # (H, ND + NC)  PyTorch (out, in)
    contract_last = (((1,), (1,)), ((), ()))          # x @ W^T without transposing W

    # z @ W1^T split into the eps part and the one-hot part (== concat then matmul).
    h = lax.dot_general(eps, w1[:, :noise_dim], contract_last,
                        preferred_element_type=jnp.float32)
    h = h + lax.dot_general(onehot, w1[:, noise_dim:], contract_last,
                            preferred_element_type=jnp.float32)
    h = h + b1_ref[...].astype(jnp.float32)

    # LeakyReLU(0.2)
    h = jnp.where(h >= 0, h, 0.2 * h)

    # representation_layer
    out = lax.dot_general(h, w2_ref[...].astype(jnp.float32), contract_last,
                          preferred_element_type=jnp.float32)
    out = out + b2_ref[...].astype(jnp.float32)
    out_ref[...] = out.astype(out_ref.dtype)


def generator_forward(params, labels, eps, *, noise_dim, n_class,
                      tile_b=128, verbose=True):
    """Pallas implementation of Generator.forward (embedding=False)."""
    w1, b1, w2, b2 = params["w1"], params["b1"], params["w2"], params["b2"]
    batch = labels.shape[0]
    hidden_dim, input_dim = w1.shape
    latent_dim = w2.shape[0]
    assert input_dim == noise_dim + n_class

    labels2d = labels.reshape(batch, 1).astype(jnp.int32)

    tb = batch if batch <= tile_b else tile_b
    grid = (pl.cdiv(batch, tb),)

    out = pl.pallas_call(
        functools.partial(_generator_fwd_kernel, noise_dim=noise_dim),
        out_shape=jax.ShapeDtypeStruct((batch, latent_dim), eps.dtype),
        grid_spec=pltpu.PrefetchScalarGridSpec(
            num_scalar_prefetch=0,
            grid=grid,
            in_specs=[
                pl.BlockSpec((tb, 1), lambda i: (i, 0)),                   # labels
                pl.BlockSpec((tb, noise_dim), lambda i: (i, 0)),           # eps
                pl.BlockSpec((hidden_dim, input_dim), lambda i: (0, 0)),   # W1 (resident)
                pl.BlockSpec((1, hidden_dim), lambda i: (0, 0)),           # b1 (resident)
                pl.BlockSpec((latent_dim, hidden_dim), lambda i: (0, 0)),  # W2 (resident)
                pl.BlockSpec((1, latent_dim), lambda i: (0, 0)),           # b2 (resident)
            ],
            out_specs=pl.BlockSpec((tb, latent_dim), lambda i: (i, 0)),
        ),
        compiler_params=pltpu.CompilerParams(
            dimension_semantics=("parallel",),   # batch tiles shard across TCs (v7x)
        ),
    )(labels2d, eps, w1, b1, w2, b2)

    result = {"output": out}
    if verbose:
        result["eps"] = eps
    return result


# -----------------------------------------------------------------------------
# DiversityLoss kernel (metric='l1' as used by the module; noise metric is l2)
# -----------------------------------------------------------------------------
def _diversity_loss_kernel(noises_ref, layer_ref, out_ref, *, metric):
    noises = noises_ref[...].astype(jnp.float32)      # (B, Dn)
    layer = layer_ref[...].astype(jnp.float32)        # (B, F)
    b = layer.shape[0]

    acc = jnp.float32(0.0)
    # Pairwise distances row-by-row (B is small); everything stays 2-D and
    # lane-parallel, with a single scalar epilogue at the end.
    for i in range(b):
        l_row = layer[i:i + 1, :]                                       # (1, F)
        if metric == "l1":
            layer_dist = jnp.mean(jnp.abs(layer - l_row), axis=1, keepdims=True)
        elif metric == "l2":
            d = layer - l_row
            layer_dist = jnp.mean(d * d, axis=1, keepdims=True)
        else:
            raise ValueError(metric)
        n_row = noises[i:i + 1, :]
        nd = noises - n_row
        noise_dist = jnp.mean(nd * nd, axis=1, keepdims=True)           # (B, 1)
        acc = acc + jnp.sum(-noise_dist * layer_dist)

    out_ref[0, 0] = jnp.exp(acc / jnp.float32(b * b))


def diversity_loss(noises, layer, *, metric="l1"):
    """Pallas implementation of DiversityLoss.forward."""
    if layer.ndim > 2:
        layer = layer.reshape(layer.shape[0], -1)

    out = pl.pallas_call(
        functools.partial(_diversity_loss_kernel, metric=metric),
        out_shape=jax.ShapeDtypeStruct((1, 1), jnp.float32),
        in_specs=[
            pl.BlockSpec(noises.shape, lambda: (0, 0)),
            pl.BlockSpec(layer.shape, lambda: (0, 0)),
        ],
        out_specs=pl.BlockSpec((1, 1), lambda: (0, 0), memory_space=pltpu.SMEM),
    )(noises, layer)
    return out[0, 0]


# -----------------------------------------------------------------------------
# Pure-JAX references
# -----------------------------------------------------------------------------
def _generator_forward_ref(params, labels, eps, n_class):
    y = jax.nn.one_hot(labels, n_class, dtype=jnp.float32)
    z = jnp.concatenate([eps.astype(jnp.float32), y], axis=1)
    h = z @ params["w1"].astype(jnp.float32).T + params["b1"].astype(jnp.float32)
    h = jnp.where(h >= 0, h, 0.2 * h)
    return h @ params["w2"].astype(jnp.float32).T + params["b2"].astype(jnp.float32)


def _diversity_loss_ref(noises, layer, *, metric="l1"):
    if layer.ndim > 2:
        layer = layer.reshape(layer.shape[0], -1)

    def pairwise(x, how):
        d = x[None, :, :] - x[:, None, :]
        if how == "l1":
            return jnp.mean(jnp.abs(d), axis=2)
        return jnp.mean(d * d, axis=2)

    layer_dist = pairwise(layer.astype(jnp.float32), metric)
    noise_dist = pairwise(noises.astype(jnp.float32), "l2")
    return jnp.exp(jnp.mean(-noise_dist * layer_dist))


# -----------------------------------------------------------------------------
if __name__ == "__main__":
    cfg = GENERATOR_CONFIG
    batch = 8
    noise_dim, n_class = cfg["noise_dim"], cfg["n_class"]
    hidden_dim, latent_dim = cfg["hidden_dim"], cfg["latent_dim"]
    input_dim = noise_dim + n_class

    key = jax.random.PRNGKey(0)
    k_eps, k_lab, k_w1, k_b1, k_w2, k_b2 = jax.random.split(key, 6)

    labels = jax.random.randint(k_lab, (batch,), 0, n_class, dtype=jnp.int32)
    eps = jax.random.uniform(k_eps, (batch, noise_dim), dtype=jnp.float32)

    params = {
        "w1": 0.1 * jax.random.normal(k_w1, (hidden_dim, input_dim), jnp.float32),
        "b1": 0.1 * jax.random.normal(k_b1, (1, hidden_dim), jnp.float32),
        "w2": 0.1 * jax.random.normal(k_w2, (latent_dim, hidden_dim), jnp.float32),
        "b2": 0.1 * jax.random.normal(k_b2, (1, latent_dim), jnp.float32),
    }

    # Generator forward.
    result = generator_forward(params, labels, eps,
                               noise_dim=noise_dim, n_class=n_class)
    out = jax.block_until_ready(result["output"])
    ref = _generator_forward_ref(params, labels, eps, n_class)
    assert jnp.allclose(out, ref, rtol=1e-4, atol=1e-4), (out, ref)

    # Diversity loss (metric='l1') over the generated representation vs the noise.
    dloss = jax.block_until_ready(diversity_loss(eps, out, metric="l1"))
    dref = _diversity_loss_ref(eps, out, metric="l1")
    assert jnp.allclose(dloss, dref, rtol=1e-4, atol=1e-5), (dloss, dref)

    print("KERNEL_OK")
</pallas_src>

<mosaic_0001>
module attributes {stable_mosaic.version = 11 : i64} {
  func.func @_generator_fwd_kernel(%arg0: i32, %arg1: memref<8x1xi32, #tpu.memory_space<vmem>>, %arg2: memref<8x32xf32, #tpu.memory_space<vmem>>, %arg3: memref<256x42xf32, #tpu.memory_space<vmem>>, %arg4: memref<1x256xf32, #tpu.memory_space<vmem>>, %arg5: memref<32x256xf32, #tpu.memory_space<vmem>>, %arg6: memref<1x32xf32, #tpu.memory_space<vmem>>, %arg7: memref<8x32xf32, #tpu.memory_space<vmem>>) attributes {dimension_semantics = [#tpu.dimension_semantics<parallel>], iteration_bounds = array<i64: 1>, scalar_prefetch = 0 : i64, scratch_operands = 0 : i64, tpu.core_type = #tpu.core_type<tc>, window_params = [{transform_indices = @transform_0, window_bounds = array<i64: 8, 1>}, {transform_indices = @transform_1, window_bounds = array<i64: 8, 32>}, {pipeline_mode = #tpu.pipeline_mode<synchronous>, transform_indices = @transform_2, window_bounds = array<i64: 256, 42>}, {pipeline_mode = #tpu.pipeline_mode<synchronous>, transform_indices = @transform_3, window_bounds = array<i64: 1, 256>}, {pipeline_mode = #tpu.pipeline_mode<synchronous>, transform_indices = @transform_4, window_bounds = array<i64: 32, 256>}, {pipeline_mode = #tpu.pipeline_mode<synchronous>, transform_indices = @transform_5, window_bounds = array<i64: 1, 32>}, {transform_indices = @transform_6, window_bounds = array<i64: 8, 32>}]} {
    %c0 = arith.constant 0 : index
    %c0_0 = arith.constant 0 : index
    %0 = vector.load %arg1[%c0, %c0_0] : memref<8x1xi32, #tpu.memory_space<vmem>>, vector<8x1xi32>
    %c0_1 = arith.constant 0 : index
    %c0_2 = arith.constant 0 : index
    %1 = vector.load %arg2[%c0_1, %c0_2] : memref<8x32xf32, #tpu.memory_space<vmem>>, vector<8x32xf32>
    %2 = tpu.iota {dimensions = array<i32: 1>} : vector<8x10xi32>
    %3 = vector.broadcast %0 : vector<8x1xi32> to vector<8x10xi32>
    %4 = arith.cmpi eq, %3, %2 : vector<8x10xi32>
    %5 = arith.extui %4 : vector<8x10xi1> to vector<8x10xi32>
    %6 = arith.sitofp %5 : vector<8x10xi32> to vector<8x10xf32>
    %c0_3 = arith.constant 0 : index
    %c0_4 = arith.constant 0 : index
    %7 = vector.load %arg3[%c0_3, %c0_4] : memref<256x42xf32, #tpu.memory_space<vmem>>, vector<256x42xf32>
    %8 = vector.extract_strided_slice %7 {offsets = [0, 0], sizes = [256, 32], strides = [1, 1]} : vector<256x42xf32> to vector<256x32xf32>
    %cst = arith.constant dense<0.000000e+00> : vector<8x256xf32>
    %9 = tpu.matmul %1, %8, %cst {dimension_numbers = #tpu.dot_dimension_numbers<[1], [1], [0], [0], [0, 0, 1, 0], [], []>} : vector<8x32xf32>, vector<256x32xf32>, vector<8x256xf32> -> vector<8x256xf32>
    %10 = vector.extract_strided_slice %7 {offsets = [0, 32], sizes = [256, 10], strides = [1, 1]} : vector<256x42xf32> to vector<256x10xf32>
    %cst_5 = arith.constant dense<0.000000e+00> : vector<8x256xf32>
    %11 = tpu.matmul %6, %10, %cst_5 {dimension_numbers = #tpu.dot_dimension_numbers<[1], [1], [0], [0], [0, 0, 1, 0], [], []>} : vector<8x10xf32>, vector<256x10xf32>, vector<8x256xf32> -> vector<8x256xf32>
    %12 = arith.addf %9, %11 : vector<8x256xf32>
    %c0_6 = arith.constant 0 : index
    %c0_7 = arith.constant 0 : index
    %13 = vector.load %arg4[%c0_6, %c0_7] : memref<1x256xf32, #tpu.memory_space<vmem>>, vector<1x256xf32>
    %14 = vector.broadcast %13 : vector<1x256xf32> to vector<8x256xf32>
    %15 = arith.addf %12, %14 : vector<8x256xf32>
    %cst_8 = arith.constant 0.000000e+00 : f32
    %16 = vector.broadcast %cst_8 : f32 to vector<8x256xf32>
    %17 = arith.cmpf oge, %15, %16 : vector<8x256xf32>
    %cst_9 = arith.constant 2.000000e-01 : f32
    %18 = vector.broadcast %cst_9 : f32 to vector<8x256xf32>
    %19 = arith.mulf %18, %15 : vector<8x256xf32>
    %20 = arith.select %17, %15, %19 : vector<8x256xi1>, vector<8x256xf32>
    %c0_10 = arith.constant 0 : index
    %c0_11 = arith.constant 0 : index
    %21 = vector.load %arg5[%c0_10, %c0_11] : memref<32x256xf32, #tpu.memory_space<vmem>>, vector<32x256xf32>
    %cst_12 = arith.constant dense<0.000000e+00> : vector<8x32xf32>
    %22 = tpu.matmul %20, %21, %cst_12 {dimension_numbers = #tpu.dot_dimension_numbers<[1], [1], [0], [0], [0, 0, 1, 0], [], []>} : vector<8x256xf32>, vector<32x256xf32>, vector<8x32xf32> -> vector<8x32xf32>
    %c0_13 = arith.constant 0 : index
    %c0_14 = arith.constant 0 : index
    %23 = vector.load %arg6[%c0_13, %c0_14] : memref<1x32xf32, #tpu.memory_space<vmem>>, vector<1x32xf32>
    %24 = vector.broadcast %23 : vector<1x32xf32> to vector<8x32xf32>
    %25 = arith.addf %22, %24 : vector<8x32xf32>
    %c0_15 = arith.constant 0 : index
    %c0_16 = arith.constant 0 : index
    %26 = vector.load %arg7[%c0_15, %c0_16] : memref<8x32xf32, #tpu.memory_space<vmem>>, vector<8x32xf32>
    tpu.vector_store %arg7[%c0_15, %c0_16], %25 {strides = array<i32>} : memref<8x32xf32, #tpu.memory_space<vmem>>, vector<8x32xf32>,
    return
  }
  func.func @transform_0(%arg0: i32) -> (i32, i32) {
    %c0_i32 = arith.constant 0 : i32
    %c0_i32_0 = arith.constant 0 : i32
    return %arg0, %c0_i32 : i32, i32
  }
  func.func @transform_1(%arg0: i32) -> (i32, i32) {
    %c0_i32 = arith.constant 0 : i32
    %c0_i32_0 = arith.constant 0 : i32
    return %arg0, %c0_i32 : i32, i32
  }
  func.func @transform_2(%arg0: i32) -> (i32, i32) {
    %c0_i32 = arith.constant 0 : i32
    %c0_i32_0 = arith.constant 0 : i32
    %c0_i32_1 = arith.constant 0 : i32
    return %c0_i32, %c0_i32_0 : i32, i32
  }
  func.func @transform_3(%arg0: i32) -> (i32, i32) {
    %c0_i32 = arith.constant 0 : i32
    %c0_i32_0 = arith.constant 0 : i32
    %c0_i32_1 = arith.constant 0 : i32
    return %c0_i32, %c0_i32_0 : i32, i32
  }
  func.func @transform_4(%arg0: i32) -> (i32, i32) {
    %c0_i32 = arith.constant 0 : i32
    %c0_i32_0 = arith.constant 0 : i32
    %c0_i32_1 = arith.constant 0 : i32
    return %c0_i32, %c0_i32_0 : i32, i32
  }
  func.func @transform_5(%arg0: i32) -> (i32, i32) {
    %c0_i32 = arith.constant 0 : i32
    %c0_i32_0 = arith.constant 0 : i32
    %c0_i32_1 = arith.constant 0 : i32
    return %c0_i32, %c0_i32_0 : i32, i32
  }
  func.func @transform_6(%arg0: i32) -> (i32, i32) {
    %c0_i32 = arith.constant 0 : i32
    %c0_i32_0 = arith.constant 0 : i32
    return %arg0, %c0_i32 : i32, i32
  }
}

</mosaic_0001>

<llo_original>
// kernel: tpu_custom_call.1
$region0: #{tpu_custom_call.1}
  #allocation0 [shape = 'u32[]', space=smem, size = 0x4, offset = 0x4, fixed_abs, tag = 'smem constant byte address 0x4 - core index']
  #allocation1 [shape = 'u32[144,128]{1,0:T(1,128)}', space=vmem, size = 0x12000, scoped, tag = 'internal scratch']
  %s0 = inlined_call_operand.vmem [shape: s32[8,1], index: 0, kind: input, shape index: {}]
  %s1 = inlined_call_operand.vmem [shape: f32[8,32], index: 1, kind: input, shape index: {}]
  %s2 = inlined_call_operand.vmem [shape: f32[256,42], index: 2, kind: input, shape index: {}]
  %s3 = inlined_call_operand.vmem [shape: f32[1,256], index: 3, kind: input, shape index: {}]
  %s4 = inlined_call_operand.vmem [shape: f32[32,256], index: 4, kind: input, shape index: {}]
  %s5 = inlined_call_operand.vmem [shape: f32[1,32], index: 5, kind: input, shape index: {}]
  %s6 = inlined_call_operand.hbm [shape: f32[8,32], index: 6, kind: output, shape index: {}]
  %s7 = sld [smem:[#allocation0]]
  $region34: #{tpu_custom_call.1} parent=0
    _
  %s9 = ssub.s32 1, %s7
  %s10 = scalar_select 0, %s9, %s7
  $region1: #{tpu_custom_call.1} parent=0
    #allocation2 [shape = 'u8[4096]{0}', space=vmem, size = 0x1000, scoped, tag = 'output window, operand 0, single buffered']
    #allocation3 [shape = 's32[1]{0}', space=sflag, size = 0x4, scoped, tag = 'scoped memory for tpu_custom_call.1']
    %11 = vsyncpa [#allocation3], 0
    // Predicated region
    $region2: #{tpu_custom_call.1} parent=1 // pred_check
      _
    $region3: #{tpu_custom_call.1} parent=1 // pred_check_branch
      %13 = sbr.rel (0) target = $region5
    $region4: #{tpu_custom_call.1} parent=1 // pred_region
      _
    $region5: #{tpu_custom_call.1} parent=1 // pred_fallthru
      _
    // Predicated region
    $region6: #{tpu_custom_call.1} parent=1 // pred_check
      _
    $region7: #{tpu_custom_call.1} parent=1 // pred_check_branch
      %15 = sbr.rel (0) target = $region9
    $region8: #{tpu_custom_call.1} parent=1 // pred_region
      _
    $region9: #{tpu_custom_call.1} parent=1 // pred_fallthru
      _
    // Predicated region
    $region10: #{tpu_custom_call.1} parent=1 // pred_check
      _
    $region11: #{tpu_custom_call.1} parent=1 // pred_check_branch
      %17 = sbr.rel (0) target = $region13
    $region12: #{tpu_custom_call.1} parent=1 // pred_region
      _
    $region13: #{tpu_custom_call.1} parent=1 // pred_fallthru
      _
    // Predicated region
    $region14: #{tpu_custom_call.1} parent=1 // pred_check
      _
    $region15: #{tpu_custom_call.1} parent=1 // pred_check_branch
      %19 = sbr.rel (0) target = $region17
    $region16: #{tpu_custom_call.1} parent=1 // pred_region
      _
    $region17: #{tpu_custom_call.1} parent=1 // pred_fallthru
      _
    // Predicated region
    $region18: #{tpu_custom_call.1} parent=1 // pred_check
      _
    $region19: #{tpu_custom_call.1} parent=1 // pred_check_branch
      %21 = sbr.rel (0) target = $region21
    $region20: #{tpu_custom_call.1} parent=1 // pred_region
      _
    $region21: #{tpu_custom_call.1} parent=1 // pred_fallthru
      _
    // Predicated region
    $region22: #{tpu_custom_call.1} parent=1 // pred_check
      _
    $region23: #{tpu_custom_call.1} parent=1 // pred_check_branch
      %23 = sbr.rel (0) target = $region25
    $region24: #{tpu_custom_call.1} parent=1 // pred_region
      _
    $region25: #{tpu_custom_call.1} parent=1 // pred_fallthru
      _
    %v24 = vld [vmem:[%s0] sm:$0xff]
    %v25 = vld [vmem:[%s1] sm:$0xff]
    %v26 = vlaneseq
    %v27 = vand.u32 %v26, 127
    %28 = vset.pattern.permute.xlu0 0
    %29 = vperm.xlu0 %28, %v24
    %v30 = vpop.permute.xlu0 %29
    %vm31 = vcmp.eq.s32.totalorder %v30, %v27
    %v32 = vsel %vm31, 1, 0
    %v33 = vcvt.s32.f32 %v32
    %v34 = vld [vmem:[%s2] sm:$0xff]
    %v35 = vld [vmem:[%s2 + $0x8] sm:$0xff]
    %v36 = vld [vmem:[%s2 + $0x10] sm:$0xff]
    %v37 = vld [vmem:[%s2 + $0x18] sm:$0xff]
    %v38 = vld [vmem:[%s2 + $0x20] sm:$0xff]
    %v39 = vld [vmem:[%s2 + $0x28] sm:$0xff]
    %v40 = vld [vmem:[%s2 + $0x30] sm:$0xff]
    %v41 = vld [vmem:[%s2 + $0x38] sm:$0xff]
    %v42 = vld [vmem:[%s2 + $0x40] sm:$0xff]
    %v43 = vld [vmem:[%s2 + $0x48] sm:$0xff]
    %v44 = vld [vmem:[%s2 + $0x50] sm:$0xff]
    %v45 = vld [vmem:[%s2 + $0x58] sm:$0xff]
    %v46 = vld [vmem:[%s2 + $0x60] sm:$0xff]
    %v47 = vld [vmem:[%s2 + $0x68] sm:$0xff]
    %v48 = vld [vmem:[%s2 + $0x70] sm:$0xff]
    %v49 = vld [vmem:[%s2 + $0x78] sm:$0xff]
    %v50 = vld [vmem:[%s2 + $0x80] sm:$0xff]
    %v51 = vld [vmem:[%s2 + $0x88] sm:$0xff]
    %v52 = vld [vmem:[%s2 + $0x90] sm:$0xff]
    %v53 = vld [vmem:[%s2 + $0x98] sm:$0xff]
    %v54 = vld [vmem:[%s2 + $0xa0] sm:$0xff]
    %v55 = vld [vmem:[%s2 + $0xa8] sm:$0xff]
    %v56 = vld [vmem:[%s2 + $0xb0] sm:$0xff]
    %v57 = vld [vmem:[%s2 + $0xb8] sm:$0xff]
    %v58 = vld [vmem:[%s2 + $0xc0] sm:$0xff]
    %v59 = vld [vmem:[%s2 + $0xc8] sm:$0xff]
    %v60 = vld [vmem:[%s2 + $0xd0] sm:$0xff]
    %v61 = vld [vmem:[%s2 + $0xd8] sm:$0xff]
    %v62 = vld [vmem:[%s2 + $0xe0] sm:$0xff]
    %v63 = vld [vmem:[%s2 + $0xe8] sm:$0xff]
    %v64 = vld [vmem:[%s2 + $0xf0] sm:$0xff]
    %v65 = vld [vmem:[%s2 + $0xf8] sm:$0xff]
    %98 = vrot.lane.b32.xlu0 %v34, 96
    %v99 = vpop.permute.xlu0 %98
    %100 = vrot.lane.b32.xlu0 %v35, 96
    %v101 = vpop.permute.xlu0 %100
    %102 = vrot.lane.b32.xlu0 %v36, 96
    %v103 = vpop.permute.xlu0 %102
    %104 = vrot.lane.b32.xlu0 %v37, 96
    %v105 = vpop.permute.xlu0 %104
    %106 = vrot.lane.b32.xlu0 %v38, 96
    %v107 = vpop.permute.xlu0 %106
    %108 = vrot.lane.b32.xlu0 %v39, 96
    %v109 = vpop.permute.xlu0 %108
    %110 = vrot.lane.b32.xlu0 %v40, 96
    %v111 = vpop.permute.xlu0 %110
    %112 = vrot.lane.b32.xlu0 %v41, 96
    %v113 = vpop.permute.xlu0 %112
    %114 = vrot.lane.b32.xlu0 %v42, 96
    %v115 = vpop.permute.xlu0 %114
    %116 = vrot.lane.b32.xlu0 %v43, 96
    %v117 = vpop.permute.xlu0 %116
    %118 = vrot.lane.b32.xlu0 %v44, 96
    %v119 = vpop.permute.xlu0 %118
    %120 = vrot.lane.b32.xlu0 %v45, 96
    %v121 = vpop.permute.xlu0 %120
    %122 = vrot.lane.b32.xlu0 %v46, 96
    %v123 = vpop.permute.xlu0 %122
    %124 = vrot.lane.b32.xlu0 %v47, 96
    %v125 = vpop.permute.xlu0 %124
    %126 = vrot.lane.b32.xlu0 %v48, 96
    %v127 = vpop.permute.xlu0 %126
    %128 = vrot.lane.b32.xlu0 %v49, 96
    %v129 = vpop.permute.xlu0 %128
    %130 = vrot.lane.b32.xlu0 %v50, 96
    %v131 = vpop.permute.xlu0 %130
    %132 = vrot.lane.b32.xlu0 %v51, 96
    %v133 = vpop.permute.xlu0 %132
    %134 = vrot.lane.b32.xlu0 %v52, 96
    %v135 = vpop.permute.xlu0 %134
    %136 = vrot.lane.b32.xlu0 %v53, 96
    %v137 = vpop.permute.xlu0 %136
    %138 = vrot.lane.b32.xlu0 %v54, 96
    %v139 = vpop.permute.xlu0 %138
    %140 = vrot.lane.b32.xlu0 %v55, 96
    %v141 = vpop.permute.xlu0 %140
    %142 = vrot.lane.b32.xlu0 %v56, 96
    %v143 = vpop.permute.xlu0 %142
    %144 = vrot.lane.b32.xlu0 %v57, 96
    %v145 = vpop.permute.xlu0 %144
    %146 = vrot.lane.b32.xlu0 %v58, 96
    %v147 = vpop.permute.xlu0 %146
    %148 = vrot.lane.b32.xlu0 %v59, 96
    %v149 = vpop.permute.xlu0 %148
    %150 = vrot.lane.b32.xlu0 %v60, 96
    %v151 = vpop.permute.xlu0 %150
    %152 = vrot.lane.b32.xlu0 %v61, 96
    %v153 = vpop.permute.xlu0 %152
    %154 = vrot.lane.b32.xlu0 %v62, 96
    %v155 = vpop.permute.xlu0 %154
    %156 = vrot.lane.b32.xlu0 %v63, 96
    %v157 = vpop.permute.xlu0 %156
    %158 = vrot.lane.b32.xlu0 %v64, 96
    %v159 = vpop.permute.xlu0 %158
    %160 = vrot.lane.b32.xlu0 %v65, 96
    %v161 = vpop.permute.xlu0 %160
    %vm162 = vcmask 80896
    %v164 = vsel %vm162, %v33, 0
    %v166 = vsel %vm162, %v99, 0
    %v168 = vsel %vm162, %v101, 0
    %v170 = vsel %vm162, %v103, 0
    %v172 = vsel %vm162, %v105, 0
    %v174 = vsel %vm162, %v107, 0
    %v176 = vsel %vm162, %v109, 0
    %v178 = vsel %vm162, %v111, 0
    %v180 = vsel %vm162, %v113, 0
    %v182 = vsel %vm162, %v115, 0
    %v184 = vsel %vm162, %v117, 0
    %v186 = vsel %vm162, %v119, 0
    %v188 = vsel %vm162, %v121, 0
    %v190 = vsel %vm162, %v123, 0
    %v192 = vsel %vm162, %v125, 0
    %v194 = vsel %vm162, %v127, 0
    %v196 = vsel %vm162, %v129, 0
    %v198 = vsel %vm162, %v131, 0
    %v200 = vsel %vm162, %v133, 0
    %v202 = vsel %vm162, %v135, 0
    %v204 = vsel %vm162, %v137, 0
    %v206 = vsel %vm162, %v139, 0
    %v208 = vsel %vm162, %v141, 0
    %v210 = vsel %vm162, %v143, 0
    %v212 = vsel %vm162, %v145, 0
    %v214 = vsel %vm162, %v147, 0
    %v216 = vsel %vm162, %v149, 0
    %v218 = vsel %vm162, %v151, 0
    %v220 = vsel %vm162, %v153, 0
    %v222 = vsel %vm162, %v155, 0
    %v224 = vsel %vm162, %v157, 0
    %v226 = vsel %vm162, %v159, 0
    %v228 = vsel %vm162, %v161, 0
    %230 = vmatprep.subr.mxu0 0.0
    %231 = vmatpush1.xpose.msra.mxu0 %v196
    %232 = vmatprep.subr.mxu0 0.0
    %233 = vmatpush1.xpose.msra.mxu0 %v194
    %234 = vmatprep.subr.mxu0 0.0
    %235 = vmatpush1.xpose.msra.mxu0 %v192
    %236 = vmatprep.subr.mxu0 0.0
    %237 = vmatpush1.xpose.msra.mxu0 %v190
    %238 = vmatprep.subr.mxu0 0.0
    %239 = vmatpush1.xpose.msra.mxu0 %v188
    %240 = vmatprep.subr.mxu0 0.0
    %241 = vmatpush1.xpose.msra.mxu0 %v186
    %242 = vmatprep.subr.mxu0 0.0
    %243 = vmatpush1.xpose.msra.mxu0 %v184
    %244 = vmatprep.subr.mxu0 0.0
    %245 = vmatpush1.xpose.msra.mxu0 %v182
    %246 = vmatprep.subr.mxu0 0.0
    %247 = vmatpush1.xpose.msra.mxu0 %v180
    %248 = vmatprep.subr.mxu0 0.0
    %249 = vmatpush1.xpose.msra.mxu0 %v178
    %250 = vmatprep.subr.mxu0 0.0
    %251 = vmatpush1.xpose.msra.mxu0 %v176
    %252 = vmatprep.subr.mxu0 0.0
    %253 = vmatpush1.xpose.msra.mxu0 %v174
    %254 = vmatprep.subr.mxu0 0.0
    %255 = vmatpush1.xpose.msra.mxu0 %v172
    %256 = vmatprep.subr.mxu0 0.0
    %257 = vmatpush1.xpose.msra.mxu0 %v170
    %258 = vmatprep.subr.mxu0 0.0
    %259 = vmatpush1.xpose.msra.mxu0 %v168
    %260 = vmatprep.subr.mxu0 0.0
    %261 = vmatpush1.xpose.msra.mxu0 %v166
    %262 = vmatprep.subr.mxu0 0.0
    %263 = vmatpush2.xpose.msra.mxu0 %v228
    %264 = vmatprep.subr.mxu0 0.0
    %265 = vmatpush2.xpose.msra.mxu0 %v226
    %266 = vmatprep.subr.mxu0 0.0
    %267 = vmatpush2.xpose.msra.mxu0 %v224
    %268 = vmatprep.subr.mxu0 0.0
    %269 = vmatpush2.xpose.msra.mxu0 %v222
    %270 = vmatprep.subr.mxu0 0.0
    %271 = vmatpush2.xpose.msra.mxu0 %v220
    %272 = vmatprep.subr.mxu0 0.0
    %273 = vmatpush2.xpose.msra.mxu0 %v218
    %274 = vmatprep.subr.mxu0 0.0
    %275 = vmatpush2.xpose.msra.mxu0 %v216
    %276 = vmatprep.subr.mxu0 0.0
    %277 = vmatpush2.xpose.msra.mxu0 %v214
    %278 = vmatprep.subr.mxu0 0.0
    %279 = vmatpush2.xpose.msra.mxu0 %v212
    %280 = vmatprep.subr.mxu0 0.0
    %281 = vmatpush2.xpose.msra.mxu0 %v210
    %282 = vmatprep.subr.mxu0 0.0
    %283 = vmatpush2.xpose.msra.mxu0 %v208
    %284 = vmatprep.subr.mxu0 0.0
    %285 = vmatpush2.xpose.msra.mxu0 %v206
    %286 = vmatprep.subr.mxu0 0.0
    %287 = vmatpush2.xpose.msra.mxu0 %v204
    %288 = vmatprep.subr.mxu0 0.0
    %289 = vmatpush2.xpose.msra.mxu0 %v202
    %290 = vmatprep.subr.mxu0 0.0
    %291 = vmatpush2.xpose.msra.mxu0 %v200
    %292 = vmatprep.subr.mxu0 0.0
    %293 = vmatpush2.xpose.msra.mxu0 %v198
    %294 = vmatprep.mubr.f32.mxu0 0.0
    %295 = vmatmul.mubr.f32.gmra.mxu0 %v164
    %v296 = vpop.f32.mrf.mxu0
    %v297 = vadd.f32 0.0, %v296
    %v298 = vpop.f32.mrf.mxu0
    %v299 = vadd.f32 0.0, %v298
    %300 = vdwg.mxu0
    %vm301 = vcmask 261120
    %v303 = vsel %vm301, %v25, 0
    %v305 = vsel %vm301, %v34, 0
    %v307 = vsel %vm301, %v35, 0
    %v309 = vsel %vm301, %v36, 0
    %v311 = vsel %vm301, %v37, 0
    %v313 = vsel %vm301, %v38, 0
    %v315 = vsel %vm301, %v39, 0
    %v317 = vsel %vm301, %v40, 0
    %v319 = vsel %vm301, %v41, 0
    %v321 = vsel %vm301, %v42, 0
    %v323 = vsel %vm301, %v43, 0
    %v325 = vsel %vm301, %v44, 0
    %v327 = vsel %vm301, %v45, 0
    %v329 = vsel %vm301, %v46, 0
    %v331 = vsel %vm301, %v47, 0
    %v333 = vsel %vm301, %v48, 0
    %v335 = vsel %vm301, %v49, 0
    %v337 = vsel %vm301, %v50, 0
    %v339 = vsel %vm301, %v51, 0
    %v341 = vsel %vm301, %v52, 0
    %v343 = vsel %vm301, %v53, 0
    %v345 = vsel %vm301, %v54, 0
    %v347 = vsel %vm301, %v55, 0
    %v349 = vsel %vm301, %v56, 0
    %v351 = vsel %vm301, %v57, 0
    %v353 = vsel %vm301, %v58, 0
    %v355 = vsel %vm301, %v59, 0
    %v357 = vsel %vm301, %v60, 0
    %v359 = vsel %vm301, %v61, 0
    %v361 = vsel %vm301, %v62, 0
    %v363 = vsel %vm301, %v63, 0
    %v365 = vsel %vm301, %v64, 0
    %v367 = vsel %vm301, %v65, 0
    %369 = vmatprep.subr.mxu0 0.0
    %370 = vmatpush1.xpose.msra.mxu0 %v335
    %371 = vmatprep.subr.mxu0 0.0
    %372 = vmatpush1.xpose.msra.mxu0 %v333
    %373 = vmatprep.subr.mxu0 0.0
    %374 = vmatpush1.xpose.msra.mxu0 %v331
    %375 = vmatprep.subr.mxu0 0.0
    %376 = vmatpush1.xpose.msra.mxu0 %v329
    %377 = vmatprep.subr.mxu0 0.0
    %378 = vmatpush1.xpose.msra.mxu0 %v327
    %379 = vmatprep.subr.mxu0 0.0
    %380 = vmatpush1.xpose.msra.mxu0 %v325
    %381 = vmatprep.subr.mxu0 0.0
    %382 = vmatpush1.xpose.msra.mxu0 %v323
    %383 = vmatprep.subr.mxu0 0.0
    %384 = vmatpush1.xpose.msra.mxu0 %v321
    %385 = vmatprep.subr.mxu0 0.0
    %386 = vmatpush1.xpose.msra.mxu0 %v319
    %387 = vmatprep.subr.mxu0 0.0
    %388 = vmatpush1.xpose.msra.mxu0 %v317
    %389 = vmatprep.subr.mxu0 0.0
    %390 = vmatpush1.xpose.msra.mxu0 %v315
    %391 = vmatprep.subr.mxu0 0.0
    %392 = vmatpush1.xpose.msra.mxu0 %v313
    %393 = vmatprep.subr.mxu0 0.0
    %394 = vmatpush1.xpose.msra.mxu0 %v311
    %395 = vmatprep.subr.mxu0 0.0
    %396 = vmatpush1.xpose.msra.mxu0 %v309
    %397 = vmatprep.subr.mxu0 0.0
    %398 = vmatpush1.xpose.msra.mxu0 %v307
    %399 = vmatprep.subr.mxu0 0.0
    %400 = vmatpush1.xpose.msra.mxu0 %v305
    %401 = vmatprep.subr.mxu0 0.0
    %402 = vmatpush2.xpose.msra.mxu0 %v367
    %403 = vmatprep.subr.mxu0 0.0
    %404 = vmatpush2.xpose.msra.mxu0 %v365
    %405 = vmatprep.subr.mxu0 0.0
    %406 = vmatpush2.xpose.msra.mxu0 %v363
    %407 = vmatprep.subr.mxu0 0.0
    %408 = vmatpush2.xpose.msra.mxu0 %v361
    %409 = vmatprep.subr.mxu0 0.0
    %410 = vmatpush2.xpose.msra.mxu0 %v359
    %411 = vmatprep.subr.mxu0 0.0
    %412 = vmatpush2.xpose.msra.mxu0 %v357
    %413 = vmatprep.subr.mxu0 0.0
    %414 = vmatpush2.xpose.msra.mxu0 %v355
    %415 = vmatprep.subr.mxu0 0.0
    %416 = vmatpush2.xpose.msra.mxu0 %v353
    %417 = vmatprep.subr.mxu0 0.0
    %418 = vmatpush2.xpose.msra.mxu0 %v351
    %419 = vmatprep.subr.mxu0 0.0
    %420 = vmatpush2.xpose.msra.mxu0 %v349
    %421 = vmatprep.subr.mxu0 0.0
    %422 = vmatpush2.xpose.msra.mxu0 %v347
    %423 = vmatprep.subr.mxu0 0.0
    %424 = vmatpush2.xpose.msra.mxu0 %v345
    %425 = vmatprep.subr.mxu0 0.0
    %426 = vmatpush2.xpose.msra.mxu0 %v343
    %427 = vmatprep.subr.mxu0 0.0
    %428 = vmatpush2.xpose.msra.mxu0 %v341
    %429 = vmatprep.subr.mxu0 0.0
    %430 = vmatpush2.xpose.msra.mxu0 %v339
    %431 = vmatprep.subr.mxu0 0.0
    %432 = vmatpush2.xpose.msra.mxu0 %v337
    %433 = vmatprep.mubr.f32.mxu0 0.0
    %434 = vmatmul.mubr.f32.gmra.mxu0 %v303
    %v435 = vpop.f32.mrf.mxu0
    %v436 = vadd.f32 %v297, %v435
    %v437 = vpop.f32.mrf.mxu0
    %v438 = vadd.f32 %v299, %v437
    %439 = vdwg.mxu0
    %v440 = vld [vmem:[%s3] sm:$0x3]
    %v442 = vlaneseq
    %v443 = vshrl.u32 %v442, 7
    %v444 = vsub.s32 0, %v443
    %v445 = vrot.slane %v440, %v444
    %v446 = vlaneseq
    %v447 = vshrl.u32 %v446, 7
    %v448 = vsub.s32 1, %v447
    %v449 = vrot.slane %v440, %v448
    %v452 = vadd.f32 %v436, %v445
    %v453 = vadd.f32 %v438, %v449
    %vm454 = vcmp.ge.f32.partialorder %v452, 0.0
    %vm455 = vcmp.ge.f32.partialorder %v453, 0.0
    %v456 = vmul.f32 %v452, 0.2
    %v457 = vmul.f32 %v453, 0.2
    %v458 = vsel %vm454, %v452, %v456
    %v459 = vsel %vm455, %v453, %v457
    %v460 = vld [vmem:[%s4] sm:$0xff]
    %v461 = vld [vmem:[%s4 + $0x8] sm:$0xff]
    %v462 = vld [vmem:[%s4 + $0x10] sm:$0xff]
    %v463 = vld [vmem:[%s4 + $0x18] sm:$0xff]
    %v464 = vld [vmem:[%s4 + $0x20] sm:$0xff]
    %v465 = vld [vmem:[%s4 + $0x28] sm:$0xff]
    %v466 = vld [vmem:[%s4 + $0x30] sm:$0xff]
    %v467 = vld [vmem:[%s4 + $0x38] sm:$0xff]
    %v468 = vld [vmem:[%s5] sm:$0x1]
    %v470 = vlaneseq
    %v471 = vshrl.u32 %v470, 7
    %v472 = vsub.s32 0, %v471
    %v473 = vrot.slane %v468, %v472
    %475 = vmatprep.subr.mxu0 0.0
    %476 = vmatpush1.xpose.msra.mxu0 0.0
    %477 = vmatprep.subr.mxu0 0.0
    %478 = vmatpush1.xpose.msra.mxu0 0.0
    %479 = vmatprep.subr.mxu0 0.0
    %480 = vmatpush1.xpose.msra.mxu0 0.0
    %481 = vmatprep.subr.mxu0 0.0
    %482 = vmatpush1.xpose.msra.mxu0 0.0
    %483 = vmatprep.subr.mxu0 0.0
    %484 = vmatpush1.xpose.msra.mxu0 0.0
    %485 = vmatprep.subr.mxu0 0.0
    %486 = vmatpush1.xpose.msra.mxu0 0.0
    %487 = vmatprep.subr.mxu0 0.0
    %488 = vmatpush1.xpose.msra.mxu0 0.0
    %489 = vmatprep.subr.mxu0 0.0
    %490 = vmatpush1.xpose.msra.mxu0 0.0
    %491 = vmatprep.subr.mxu0 0.0
    %492 = vmatpush1.xpose.msra.mxu0 0.0
    %493 = vmatprep.subr.mxu0 0.0
    %494 = vmatpush1.xpose.msra.mxu0 0.0
    %495 = vmatprep.subr.mxu0 0.0
    %496 = vmatpush1.xpose.msra.mxu0 0.0
    %497 = vmatprep.subr.mxu0 0.0
    %498 = vmatpush1.xpose.msra.mxu0 0.0
    %499 = vmatprep.subr.mxu0 %v467
    %500 = vmatpush1.xpose.msra.mxu0 %v466
    %501 = vmatprep.subr.mxu0 %v465
    %502 = vmatpush1.xpose.msra.mxu0 %v464
    %503 = vmatprep.subr.mxu0 %v463
    %504 = vmatpush1.xpose.msra.mxu0 %v462
    %505 = vmatprep.subr.mxu0 %v461
    %506 = vmatpush1.xpose.msra.mxu0 %v460
    %507 = vmatprep.subr.mxu0 0.0
    %508 = vmatpush2.xpose.msra.mxu0 0.0
    %509 = vmatprep.subr.mxu0 0.0
    %510 = vmatpush2.xpose.msra.mxu0 0.0
    %511 = vmatprep.subr.mxu0 0.0
    %512 = vmatpush2.xpose.msra.mxu0 0.0
    %513 = vmatprep.subr.mxu0 0.0
    %514 = vmatpush2.xpose.msra.mxu0 0.0
    %515 = vmatprep.subr.mxu0 0.0
    %516 = vmatpush2.xpose.msra.mxu0 0.0
    %517 = vmatprep.subr.mxu0 0.0
    %518 = vmatpush2.xpose.msra.mxu0 0.0
    %519 = vmatprep.subr.mxu0 0.0
    %520 = vmatpush2.xpose.msra.mxu0 0.0
    %521 = vmatprep.subr.mxu0 0.0
    %522 = vmatpush2.xpose.msra.mxu0 0.0
    %523 = vmatprep.subr.mxu0 0.0
    %524 = vmatpush2.xpose.msra.mxu0 0.0
    %525 = vmatprep.subr.mxu0 0.0
    %526 = vmatpush2.xpose.msra.mxu0 0.0
    %527 = vmatprep.subr.mxu0 0.0
    %528 = vmatpush2.xpose.msra.mxu0 0.0
    %529 = vmatprep.subr.mxu0 0.0
    %530 = vmatpush2.xpose.msra.mxu0 0.0
    %531 = vmatprep.subr.mxu0 0.0
    %532 = vmatpush2.xpose.msra.mxu0 0.0
    %533 = vmatprep.subr.mxu0 0.0
    %534 = vmatpush2.xpose.msra.mxu0 0.0
    %535 = vmatprep.subr.mxu0 0.0
    %536 = vmatpush2.xpose.msra.mxu0 0.0
    %537 = vmatprep.subr.mxu0 0.0
    %538 = vmatpush2.xpose.msra.mxu0 0.0
    %539 = vmatprep.mubr.f32.mxu0 %v459
    %540 = vmatmul.mubr.f32.gmra.mxu0 %v458
    %v541 = vpop.f32.mrf.mxu0
    %v542 = vadd.f32 %v473, %v541
    %v543 = vpop.f32.mrf.mxu0
    %544 = vdwg.mxu0
    %545 = vst.msk [vmem:[#allocation2] sm:$0xff] %vm301, %v542
    // Predicated region
    $region26: #{tpu_custom_call.1} parent=1 // pred_check
      _
    $region27: #{tpu_custom_call.1} parent=1 // pred_check_branch
      %547 = sbr.rel (0) target = $region29
    $region28: #{tpu_custom_call.1} parent=1 // pred_region
      %s549 = ssub.s32 128, 128
      %550 = vsyncadd [#allocation3], %s549
      %s552 = sshll.u32 [#allocation2], 4
      %s553 = int_to_ptr.vmem [resolvable:$true] %s552
      %555 = dma.vmem_to_hbm [thread:$0]  %s553, 128, %s6, [#allocation3]
    $region29: #{tpu_custom_call.1} parent=1 // pred_fallthru
      _
    // Predicated region
    $region30: #{tpu_custom_call.1} parent=1 // pred_check
      _
    $region31: #{tpu_custom_call.1} parent=1 // pred_check_branch
      %557 = sbr.rel (0) target = $region33
    $region32: #{tpu_custom_call.1} parent=1 // pred_region
      %558 = dma.done [#allocation3], 128
    $region33: #{tpu_custom_call.1} parent=1 // pred_fallthru
      _
    %559 = vsyncpa [#allocation3], 1

</llo_original>
